<compile_context>
chip_gen: v7x
topology: tpu7x:2x2x1
jax: 0.10.0
libtpu: 0.0.40
codegen_flags: <defaults>
</compile_context>

<pallas_src>
import jax
import jax.numpy as jnp
from jax.experimental import pallas as pl
from jax.experimental.pallas import tpu as pltpu


def acpolicy_kernel(x_ref, w1_ref, b1_ref, w2_ref, b2_ref,
                    w3l_ref, b3l_ref, w3s_ref, b3s_ref,
                    z_ref, out_ref):
    na = z_ref.shape[1]

    # trunk: Linear -> ReLU -> Linear -> ReLU -> Linear (bf16 MXU, f32 accum)
    xb = x_ref[...].astype(jnp.bfloat16)
    h1 = jnp.dot(xb, w1_ref[...], preferred_element_type=jnp.float32)
    h1 = jnp.maximum(h1 + b1_ref[...], 0.0)
    h2 = jnp.dot(h1.astype(jnp.bfloat16), w2_ref[...],
                 preferred_element_type=jnp.float32)
    h2 = jnp.maximum(h2 + b2_ref[...], 0.0)
    h2b = h2.astype(jnp.bfloat16)

    # split head (weights pre-split outside the kernel -> lane-contiguous)
    loc_logits = jnp.dot(h2b, w3l_ref[...],
                         preferred_element_type=jnp.float32) + b3l_ref[...]
    scale_logits = jnp.dot(h2b, w3s_ref[...],
                           preferred_element_type=jnp.float32) + b3s_ref[...]

    # dist_create
    min_log_std, max_log_std = -5.0, 5.0
    loc = jnp.tanh(loc_logits)
    sig = pl.reciprocal(1.0 + jnp.exp(-scale_logits), approx=True)  # sigmoid
    log_std = min_log_std + sig * (max_log_std - min_log_std)
    log_std = jnp.clip(log_std, min_log_std, max_log_std)
    std = jnp.exp(log_std)

    # dist_sample_no_postprocess: action = z * std + mu
    action = z_ref[...] * std + loc

    # fused lane-contiguous output block: [action | std | log_std]
    out_ref[:, :na] = action
    out_ref[:, na:2 * na] = std
    out_ref[:, 2 * na:] = log_std


def acpolicy_forward(x, params, z, *, block_b=256):
    """x: (B, num_inputs) f32, z: (B, num_outputs) f32 standard-normal noise.

    Returns (action, std, log_std) matching the PyTorch module:
      action: (B * num_outputs, 1), std/log_std: (B, num_outputs).
    """
    w1, b1, w2, b2, w3l, b3l, w3s, b3s = params
    B, num_inputs = x.shape
    na = w3l.shape[1]

    # batch tile: multiple of 8 sublanes; pad batch so it divides evenly
    if B >= block_b:
        tb = block_b
    else:
        tb = max(8, ((B + 7) // 8) * 8)
    bp = ((B + tb - 1) // tb) * tb
    if bp != B:
        x = jnp.pad(x, ((0, bp - B), (0, 0)))
        z = jnp.pad(z, ((0, bp - B), (0, 0)))

    row_spec = lambda cols: pl.BlockSpec((tb, cols), lambda i: (i, 0))
    const_spec = lambda arr: pl.BlockSpec(arr.shape, lambda i: (0, 0))

    fused = pl.pallas_call(
        acpolicy_kernel,
        out_shape=jax.ShapeDtypeStruct((bp, 3 * na), jnp.float32),
        grid=(bp // tb,),
        in_specs=[
            row_spec(num_inputs),
            const_spec(w1), const_spec(b1),
            const_spec(w2), const_spec(b2),
            const_spec(w3l), const_spec(b3l),
            const_spec(w3s), const_spec(b3s),
            row_spec(na),
        ],
        out_specs=pl.BlockSpec((tb, 3 * na), lambda i: (i, 0)),
        compiler_params=pltpu.CompilerParams(
            dimension_semantics=("parallel",)),
    )(x, w1, b1, w2, b2, w3l, b3l, w3s, b3s, z)

    act2d = fused[:B, :na]
    std = fused[:B, na:2 * na]
    log_std = fused[:B, 2 * na:]
    # match PyTorch: mu/std reshaped to (-1, 1) -> action is (B*num_outputs, 1)
    action = act2d.reshape(-1, 1)
    return action, std, log_std


def init_params(key, num_inputs, num_outputs, hidden_dim=64, hidden_depth=2):
    assert hidden_depth == 2  # matches the default ACPolicy configuration
    keys = jax.random.split(key, 6)

    def linear(kw, kb, fan_in, fan_out):
        # deterministic Kaiming-uniform-ish init (like nn.Linear defaults)
        bound = 1.0 / (fan_in ** 0.5)
        w = jax.random.uniform(kw, (fan_in, fan_out), jnp.float32, -bound, bound)
        b = jax.random.uniform(kb, (1, fan_out), jnp.float32, -bound, bound)
        return w, b

    w1, b1 = linear(keys[0], keys[1], num_inputs, hidden_dim)
    w2, b2 = linear(keys[2], keys[3], hidden_dim, hidden_dim)
    w3, b3 = linear(keys[4], keys[5], hidden_dim, num_outputs * 2)

    # split the head exactly like torch.split(logits, na, dim=-1)
    w3l, w3s = w3[:, :num_outputs], w3[:, num_outputs:]
    b3l, b3s = b3[:, :num_outputs], b3[:, num_outputs:]

    # bf16 weights for the MXU / halved DMA; biases stay f32
    bf16 = lambda w: w.astype(jnp.bfloat16)
    return (bf16(w1), b1, bf16(w2), b2, bf16(w3l), b3l, bf16(w3s), b3s)


if __name__ == "__main__":
    B, NUM_INPUTS, NUM_OUTPUTS, HIDDEN = 4, 16, 4, 64

    root = jax.random.PRNGKey(0)
    k_params, k_x, k_z = jax.random.split(root, 3)

    params = init_params(k_params, NUM_INPUTS, NUM_OUTPUTS, hidden_dim=HIDDEN)
    x = jax.random.normal(k_x, (B, NUM_INPUTS), jnp.float32)
    # torch.normal(zeros, ones) -> pass standard-normal noise in explicitly
    z = jax.random.normal(k_z, (B, NUM_OUTPUTS), jnp.float32)

    action, std, log_std = jax.jit(acpolicy_forward)(x, params, z)
    jax.block_until_ready((action, std, log_std))

    assert action.shape == (B * NUM_OUTPUTS, 1)
    assert std.shape == (B, NUM_OUTPUTS)
    assert log_std.shape == (B, NUM_OUTPUTS)
    assert bool(jnp.all(jnp.isfinite(action)))
    assert bool(jnp.all(std > 0.0))
    assert bool(jnp.all((log_std >= -5.0) & (log_std <= 5.0)))

    print("KERNEL_OK")
</pallas_src>

<mosaic_0001>
module attributes {stable_mosaic.version = 11 : i64} {
  func.func @acpolicy_kernel(%arg0: i32, %arg1: memref<8x16xf32, #tpu.memory_space<vmem>>, %arg2: memref<16x64xbf16, #tpu.memory_space<vmem>>, %arg3: memref<1x64xf32, #tpu.memory_space<vmem>>, %arg4: memref<64x64xbf16, #tpu.memory_space<vmem>>, %arg5: memref<1x64xf32, #tpu.memory_space<vmem>>, %arg6: memref<64x4xbf16, #tpu.memory_space<vmem>>, %arg7: memref<1x4xf32, #tpu.memory_space<vmem>>, %arg8: memref<64x4xbf16, #tpu.memory_space<vmem>>, %arg9: memref<1x4xf32, #tpu.memory_space<vmem>>, %arg10: memref<8x4xf32, #tpu.memory_space<vmem>>, %arg11: memref<8x12xf32, #tpu.memory_space<vmem>>) attributes {dimension_semantics = [#tpu.dimension_semantics<parallel>], iteration_bounds = array<i64: 1>, scalar_prefetch = 0 : i64, scratch_operands = 0 : i64, tpu.core_type = #tpu.core_type<tc>, window_params = [{transform_indices = @transform_0, window_bounds = array<i64: 8, 16>}, {pipeline_mode = #tpu.pipeline_mode<synchronous>, transform_indices = @transform_1, window_bounds = array<i64: 16, 64>}, {pipeline_mode = #tpu.pipeline_mode<synchronous>, transform_indices = @transform_2, window_bounds = array<i64: 1, 64>}, {pipeline_mode = #tpu.pipeline_mode<synchronous>, transform_indices = @transform_3, window_bounds = array<i64: 64, 64>}, {pipeline_mode = #tpu.pipeline_mode<synchronous>, transform_indices = @transform_4, window_bounds = array<i64: 1, 64>}, {pipeline_mode = #tpu.pipeline_mode<synchronous>, transform_indices = @transform_5, window_bounds = array<i64: 64, 4>}, {pipeline_mode = #tpu.pipeline_mode<synchronous>, transform_indices = @transform_6, window_bounds = array<i64: 1, 4>}, {pipeline_mode = #tpu.pipeline_mode<synchronous>, transform_indices = @transform_7, window_bounds = array<i64: 64, 4>}, {pipeline_mode = #tpu.pipeline_mode<synchronous>, transform_indices = @transform_8, window_bounds = array<i64: 1, 4>}, {transform_indices = @transform_9, window_bounds = array<i64: 8, 4>}, {transform_indices = @transform_10, window_bounds = array<i64: 8, 12>}]} {
    %c0 = arith.constant 0 : index
    %c0_0 = arith.constant 0 : index
    %0 = vector.load %arg1[%c0, %c0_0] : memref<8x16xf32, #tpu.memory_space<vmem>>, vector<8x16xf32>
    %1 = arith.truncf %0 : vector<8x16xf32> to vector<8x16xbf16>
    %c0_1 = arith.constant 0 : index
    %c0_2 = arith.constant 0 : index
    %2 = vector.load %arg2[%c0_1, %c0_2] : memref<16x64xbf16, #tpu.memory_space<vmem>>, vector<16x64xbf16>
    %cst = arith.constant dense<0.000000e+00> : vector<8x64xf32>
    %3 = tpu.matmul %1, %2, %cst {dimension_numbers = #tpu.dot_dimension_numbers<[1], [0], [0], [1], [0, 0, 1, 1], [], []>} : vector<8x16xbf16>, vector<16x64xbf16>, vector<8x64xf32> -> vector<8x64xf32>
    %c0_3 = arith.constant 0 : index
    %c0_4 = arith.constant 0 : index
    %4 = vector.load %arg3[%c0_3, %c0_4] : memref<1x64xf32, #tpu.memory_space<vmem>>, vector<1x64xf32>
    %5 = vector.broadcast %4 : vector<1x64xf32> to vector<8x64xf32>
    %6 = arith.addf %3, %5 : vector<8x64xf32>
    %cst_5 = arith.constant 0.000000e+00 : f32
    %7 = vector.broadcast %cst_5 : f32 to vector<8x64xf32>
    %8 = arith.maximumf %6, %7 : vector<8x64xf32>
    %9 = arith.truncf %8 : vector<8x64xf32> to vector<8x64xbf16>
    %c0_6 = arith.constant 0 : index
    %c0_7 = arith.constant 0 : index
    %10 = vector.load %arg4[%c0_6, %c0_7] : memref<64x64xbf16, #tpu.memory_space<vmem>>, vector<64x64xbf16>
    %cst_8 = arith.constant dense<0.000000e+00> : vector<8x64xf32>
    %11 = tpu.matmul %9, %10, %cst_8 {dimension_numbers = #tpu.dot_dimension_numbers<[1], [0], [0], [1], [0, 0, 1, 1], [], []>} : vector<8x64xbf16>, vector<64x64xbf16>, vector<8x64xf32> -> vector<8x64xf32>
    %c0_9 = arith.constant 0 : index
    %c0_10 = arith.constant 0 : index
    %12 = vector.load %arg5[%c0_9, %c0_10] : memref<1x64xf32, #tpu.memory_space<vmem>>, vector<1x64xf32>
    %13 = vector.broadcast %12 : vector<1x64xf32> to vector<8x64xf32>
    %14 = arith.addf %11, %13 : vector<8x64xf32>
    %cst_11 = arith.constant 0.000000e+00 : f32
    %15 = vector.broadcast %cst_11 : f32 to vector<8x64xf32>
    %16 = arith.maximumf %14, %15 : vector<8x64xf32>
    %17 = arith.truncf %16 : vector<8x64xf32> to vector<8x64xbf16>
    %c0_12 = arith.constant 0 : index
    %c0_13 = arith.constant 0 : index
    %18 = vector.load %arg6[%c0_12, %c0_13] : memref<64x4xbf16, #tpu.memory_space<vmem>>, vector<64x4xbf16>
    %cst_14 = arith.constant dense<0.000000e+00> : vector<8x4xf32>
    %19 = tpu.matmul %17, %18, %cst_14 {dimension_numbers = #tpu.dot_dimension_numbers<[1], [0], [0], [1], [0, 0, 1, 1], [], []>} : vector<8x64xbf16>, vector<64x4xbf16>, vector<8x4xf32> -> vector<8x4xf32>
    %c0_15 = arith.constant 0 : index
    %c0_16 = arith.constant 0 : index
    %20 = vector.load %arg7[%c0_15, %c0_16] : memref<1x4xf32, #tpu.memory_space<vmem>>, vector<1x4xf32>
    %21 = vector.broadcast %20 : vector<1x4xf32> to vector<8x4xf32>
    %22 = arith.addf %19, %21 : vector<8x4xf32>
    %c0_17 = arith.constant 0 : index
    %c0_18 = arith.constant 0 : index
    %23 = vector.load %arg8[%c0_17, %c0_18] : memref<64x4xbf16, #tpu.memory_space<vmem>>, vector<64x4xbf16>
    %cst_19 = arith.constant dense<0.000000e+00> : vector<8x4xf32>
    %24 = tpu.matmul %17, %23, %cst_19 {dimension_numbers = #tpu.dot_dimension_numbers<[1], [0], [0], [1], [0, 0, 1, 1], [], []>} : vector<8x64xbf16>, vector<64x4xbf16>, vector<8x4xf32> -> vector<8x4xf32>
    %c0_20 = arith.constant 0 : index
    %c0_21 = arith.constant 0 : index
    %25 = vector.load %arg9[%c0_20, %c0_21] : memref<1x4xf32, #tpu.memory_space<vmem>>, vector<1x4xf32>
    %26 = vector.broadcast %25 : vector<1x4xf32> to vector<8x4xf32>
    %27 = arith.addf %24, %26 : vector<8x4xf32>
    %28 = math.tanh %22 : vector<8x4xf32>
    %cst_22 = arith.constant 0.000000e+00 : f32
    %29 = vector.broadcast %cst_22 : f32 to vector<8x4xf32>
    %30 = arith.subf %29, %27 : vector<8x4xf32>
    %31 = math.exp %30 : vector<8x4xf32>
    %cst_23 = arith.constant 1.000000e+00 : f32
    %32 = vector.broadcast %cst_23 : f32 to vector<8x4xf32>
    %33 = arith.addf %32, %31 : vector<8x4xf32>
    %34 = tpu.reciprocal %33 {approx = true} : vector<8x4xf32> -> vector<8x4xf32>
    %cst_24 = arith.constant 1.000000e+01 : f32
    %35 = vector.broadcast %cst_24 : f32 to vector<8x4xf32>
    %36 = arith.mulf %34, %35 : vector<8x4xf32>
    %cst_25 = arith.constant -5.000000e+00 : f32
    %37 = vector.broadcast %cst_25 : f32 to vector<8x4xf32>
    %38 = arith.addf %37, %36 : vector<8x4xf32>
    %cst_26 = arith.constant -5.000000e+00 : f32
    %cst_27 = arith.constant 5.000000e+00 : f32
    %39 = vector.broadcast %cst_26 : f32 to vector<8x4xf32>
    %40 = arith.maximumf %39, %38 : vector<8x4xf32>
    %41 = vector.broadcast %cst_27 : f32 to vector<8x4xf32>
    %42 = arith.minimumf %41, %40 : vector<8x4xf32>
    %43 = math.exp %42 : vector<8x4xf32>
    %c0_28 = arith.constant 0 : index
    %c0_29 = arith.constant 0 : index
    %44 = vector.load %arg10[%c0_28, %c0_29] : memref<8x4xf32, #tpu.memory_space<vmem>>, vector<8x4xf32>
    %45 = arith.mulf %44, %43 : vector<8x4xf32>
    %46 = arith.addf %45, %28 : vector<8x4xf32>
    %c0_30 = arith.constant 0 : index
    %c0_31 = arith.constant 0 : index
    %47 = vector.load %arg11[%c0_30, %c0_31] : memref<8x12xf32, #tpu.memory_space<vmem>>, vector<8x4xf32>
    tpu.vector_store %arg11[%c0_30, %c0_31], %46 {strides = array<i32>} : memref<8x12xf32, #tpu.memory_space<vmem>>, vector<8x4xf32>,
    %c0_32 = arith.constant 0 : index
    %c4 = arith.constant 4 : index
    %48 = vector.load %arg11[%c0_32, %c4] : memref<8x12xf32, #tpu.memory_space<vmem>>, vector<8x4xf32>
    tpu.vector_store %arg11[%c0_32, %c4], %43 {strides = array<i32>} : memref<8x12xf32, #tpu.memory_space<vmem>>, vector<8x4xf32>,
    %c0_33 = arith.constant 0 : index
    %c8 = arith.constant 8 : index
    %49 = vector.load %arg11[%c0_33, %c8] : memref<8x12xf32, #tpu.memory_space<vmem>>, vector<8x4xf32>
    tpu.vector_store %arg11[%c0_33, %c8], %42 {strides = array<i32>} : memref<8x12xf32, #tpu.memory_space<vmem>>, vector<8x4xf32>,
    return
  }
  func.func @transform_0(%arg0: i32) -> (i32, i32) {
    %c0_i32 = arith.constant 0 : i32
    %c0_i32_0 = arith.constant 0 : i32
    return %arg0, %c0_i32 : i32, i32
  }
  func.func @transform_1(%arg0: i32) -> (i32, i32) {
    %c0_i32 = arith.constant 0 : i32
    %c0_i32_0 = arith.constant 0 : i32
    %c0_i32_1 = arith.constant 0 : i32
    return %c0_i32, %c0_i32_0 : i32, i32
  }
  func.func @transform_2(%arg0: i32) -> (i32, i32) {
    %c0_i32 = arith.constant 0 : i32
    %c0_i32_0 = arith.constant 0 : i32
    %c0_i32_1 = arith.constant 0 : i32
    return %c0_i32, %c0_i32_0 : i32, i32
  }
  func.func @transform_3(%arg0: i32) -> (i32, i32) {
    %c0_i32 = arith.constant 0 : i32
    %c0_i32_0 = arith.constant 0 : i32
    %c0_i32_1 = arith.constant 0 : i32
    return %c0_i32, %c0_i32_0 : i32, i32
  }
  func.func @transform_4(%arg0: i32) -> (i32, i32) {
    %c0_i32 = arith.constant 0 : i32
    %c0_i32_0 = arith.constant 0 : i32
    %c0_i32_1 = arith.constant 0 : i32
    return %c0_i32, %c0_i32_0 : i32, i32
  }
  func.func @transform_5(%arg0: i32) -> (i32, i32) {
    %c0_i32 = arith.constant 0 : i32
    %c0_i32_0 = arith.constant 0 : i32
    %c0_i32_1 = arith.constant 0 : i32
    return %c0_i32, %c0_i32_0 : i32, i32
  }
  func.func @transform_6(%arg0: i32) -> (i32, i32) {
    %c0_i32 = arith.constant 0 : i32
    %c0_i32_0 = arith.constant 0 : i32
    %c0_i32_1 = arith.constant 0 : i32
    return %c0_i32, %c0_i32_0 : i32, i32
  }
  func.func @transform_7(%arg0: i32) -> (i32, i32) {
    %c0_i32 = arith.constant 0 : i32
    %c0_i32_0 = arith.constant 0 : i32
    %c0_i32_1 = arith.constant 0 : i32
    return %c0_i32, %c0_i32_0 : i32, i32
  }
  func.func @transform_8(%arg0: i32) -> (i32, i32) {
    %c0_i32 = arith.constant 0 : i32
    %c0_i32_0 = arith.constant 0 : i32
    %c0_i32_1 = arith.constant 0 : i32
    return %c0_i32, %c0_i32_0 : i32, i32
  }
  func.func @transform_9(%arg0: i32) -> (i32, i32) {
    %c0_i32 = arith.constant 0 : i32
    %c0_i32_0 = arith.constant 0 : i32
    return %arg0, %c0_i32 : i32, i32
  }
  func.func @transform_10(%arg0: i32) -> (i32, i32) {
    %c0_i32 = arith.constant 0 : i32
    %c0_i32_0 = arith.constant 0 : i32
    return %arg0, %c0_i32 : i32, i32
  }
}

</mosaic_0001>

<llo_original>
// kernel: acpolicy_forward.1
$region0: #{acpolicy_forward.1}
  #allocation0 [shape = 'u32[]', space=smem, size = 0x4, offset = 0x4, fixed_abs, tag = 'smem constant byte address 0x4 - core index']
  #allocation1 [shape = 'u32[144,128]{1,0:T(1,128)}', space=vmem, size = 0x12000, scoped, tag = 'internal scratch']
  %s0 = inlined_call_operand.vmem [shape: f32[8,16], index: 0, kind: input, shape index: {}]
  %s1 = inlined_call_operand.vmem [shape: bf16[16,64], index: 1, kind: input, shape index: {}]
  %s2 = inlined_call_operand.vmem [shape: f32[1,64], index: 2, kind: input, shape index: {}]
  %s3 = inlined_call_operand.vmem [shape: bf16[64,64], index: 3, kind: input, shape index: {}]
  %s4 = inlined_call_operand.vmem [shape: f32[1,64], index: 4, kind: input, shape index: {}]
  %s5 = inlined_call_operand.vmem [shape: bf16[64,4], index: 5, kind: input, shape index: {}]
  %s6 = inlined_call_operand.vmem [shape: f32[1,4], index: 6, kind: input, shape index: {}]
  %s7 = inlined_call_operand.vmem [shape: bf16[64,4], index: 7, kind: input, shape index: {}]
  %s8 = inlined_call_operand.vmem [shape: f32[1,4], index: 8, kind: input, shape index: {}]
  %s9 = inlined_call_operand.vmem [shape: f32[8,4], index: 9, kind: input, shape index: {}]
  %s10 = inlined_call_operand.vmem [shape: f32[8,12], index: 10, kind: output, shape index: {}]
  %s11 = sld [smem:[#allocation0]]
  $region50: #{acpolicy_forward.1} parent=0
    _
  %s13 = ssub.s32 1, %s11
  %s14 = scalar_select 0, %s13, %s11
  // Predicated region
  $region2: #{acpolicy_forward.1} parent=0 // pred_check
    _
  $region3: #{acpolicy_forward.1} parent=0 // pred_check_branch
    %16 = sbr.rel (0) target = $region5
  $region4: #{acpolicy_forward.1} parent=0 // pred_region
    _
  $region5: #{acpolicy_forward.1} parent=0 // pred_fallthru
    _
  // Predicated region
  $region6: #{acpolicy_forward.1} parent=0 // pred_check
    _
  $region7: #{acpolicy_forward.1} parent=0 // pred_check_branch
    %18 = sbr.rel (0) target = $region9
  $region8: #{acpolicy_forward.1} parent=0 // pred_region
    _
  $region9: #{acpolicy_forward.1} parent=0 // pred_fallthru
    _
  // Predicated region
  $region10: #{acpolicy_forward.1} parent=0 // pred_check
    _
  $region11: #{acpolicy_forward.1} parent=0 // pred_check_branch
    %20 = sbr.rel (0) target = $region13
  $region12: #{acpolicy_forward.1} parent=0 // pred_region
    _
  $region13: #{acpolicy_forward.1} parent=0 // pred_fallthru
    _
  // Predicated region
  $region14: #{acpolicy_forward.1} parent=0 // pred_check
    _
  $region15: #{acpolicy_forward.1} parent=0 // pred_check_branch
    %22 = sbr.rel (0) target = $region17
  $region16: #{acpolicy_forward.1} parent=0 // pred_region
    _
  $region17: #{acpolicy_forward.1} parent=0 // pred_fallthru
    _
  // Predicated region
  $region18: #{acpolicy_forward.1} parent=0 // pred_check
    _
  $region19: #{acpolicy_forward.1} parent=0 // pred_check_branch
    %24 = sbr.rel (0) target = $region21
  $region20: #{acpolicy_forward.1} parent=0 // pred_region
    _
  $region21: #{acpolicy_forward.1} parent=0 // pred_fallthru
    _
  // Predicated region
  $region22: #{acpolicy_forward.1} parent=0 // pred_check
    _
  $region23: #{acpolicy_forward.1} parent=0 // pred_check_branch
    %26 = sbr.rel (0) target = $region25
  $region24: #{acpolicy_forward.1} parent=0 // pred_region
    _
  $region25: #{acpolicy_forward.1} parent=0 // pred_fallthru
    _
  // Predicated region
  $region26: #{acpolicy_forward.1} parent=0 // pred_check
    _
  $region27: #{acpolicy_forward.1} parent=0 // pred_check_branch
    %28 = sbr.rel (0) target = $region29
  $region28: #{acpolicy_forward.1} parent=0 // pred_region
    _
  $region29: #{acpolicy_forward.1} parent=0 // pred_fallthru
    _
  // Predicated region
  $region30: #{acpolicy_forward.1} parent=0 // pred_check
    _
  $region31: #{acpolicy_forward.1} parent=0 // pred_check_branch
    %30 = sbr.rel (0) target = $region33
  $region32: #{acpolicy_forward.1} parent=0 // pred_region
    _
  $region33: #{acpolicy_forward.1} parent=0 // pred_fallthru
    _
  // Predicated region
  $region34: #{acpolicy_forward.1} parent=0 // pred_check
    _
  $region35: #{acpolicy_forward.1} parent=0 // pred_check_branch
    %32 = sbr.rel (0) target = $region37
  $region36: #{acpolicy_forward.1} parent=0 // pred_region
    _
  $region37: #{acpolicy_forward.1} parent=0 // pred_fallthru
    _
  // Predicated region
  $region38: #{acpolicy_forward.1} parent=0 // pred_check
    _
  $region39: #{acpolicy_forward.1} parent=0 // pred_check_branch
    %34 = sbr.rel (0) target = $region41
  $region40: #{acpolicy_forward.1} parent=0 // pred_region
    _
  $region41: #{acpolicy_forward.1} parent=0 // pred_fallthru
    _
  %v36 = vld [vmem:[%s0] sm:$0xff]
  %v37 = vpack.c.bf16 %v36, %v36
  %v38 = vld [vmem:[%s1] sm:$0xf]
  %v39 = vld [vmem:[%s1 + $0x4] sm:$0xf]
  %v40 = vld [vmem:[%s2] sm:$0x1]
  %v42 = vlaneseq
  %v43 = vshrl.u32 %v42, 7
  %v44 = vsub.s32 0, %v43
  %v45 = vrot.slane %v40, %v44
  %v49 = vunpack.c.l.b16 %v38
  %v50 = vunpack.c.l.b16 %v39
  %v51 = vpack.c.b16 %v50, %v49
  %vm53 = vcmask 130048
  %v55 = vsel %vm53, %v37, 0
  %57 = vmatprep.subr.bf16.mxu0 0
  %58 = vmatpush1.bf16.msra.mxu0 %v51
  %59 = vmatprep.subr.bf16.mxu0 0
  %60 = vmatpush1.bf16.msra.mxu0 0
  %61 = vmatprep.subr.bf16.mxu0 0
  %62 = vmatpush1.bf16.msra.mxu0 0
  %63 = vmatprep.subr.bf16.mxu0 0
  %64 = vmatpush1.bf16.msra.mxu0 0
  %65 = vmatprep.subr.bf16.mxu0 0
  %66 = vmatpush1.bf16.msra.mxu0 0
  %67 = vmatprep.subr.bf16.mxu0 0
  %68 = vmatpush1.bf16.msra.mxu0 0
  %69 = vmatprep.subr.bf16.mxu0 0
  %70 = vmatpush1.bf16.msra.mxu0 0
  %71 = vmatprep.subr.bf16.mxu0 0
  %72 = vmatpush1.bf16.msra.mxu0 0
  %73 = vmatprep.subr.bf16.mxu0 0
  %74 = vmatpush1.bf16.msra.mxu0 0
  %75 = vmatprep.subr.bf16.mxu0 0
  %76 = vmatpush1.bf16.msra.mxu0 0
  %77 = vmatprep.subr.bf16.mxu0 0
  %78 = vmatpush1.bf16.msra.mxu0 0
  %79 = vmatprep.subr.bf16.mxu0 0
  %80 = vmatpush1.bf16.msra.mxu0 0
  %81 = vmatprep.subr.bf16.mxu0 0
  %82 = vmatpush1.bf16.msra.mxu0 0
  %83 = vmatprep.subr.bf16.mxu0 0
  %84 = vmatpush1.bf16.msra.mxu0 0
  %85 = vmatprep.subr.bf16.mxu0 0
  %86 = vmatpush1.bf16.msra.mxu0 0
  %87 = vmatprep.subr.bf16.mxu0 0
  %88 = vmatpush1.bf16.msra.mxu0 0
  %89 = vmatprep.mubr.bf16.mxu0 0
  %90 = vmatmul.mubr.bf16.gmra.mrb[0].mxu0 %v55
  %v91 = vpop.f32.mrb[0].mxu0
  %v92 = vadd.f32 %v45, %v91
  %v93 = vpop.f32.mrb[0].mxu0
  %v94 = vpop.f32.mrb[0].mxu0
  %v95 = vpop.f32.mrb[0].mxu0
  %96 = vdwg.mxu0
  %v97 = vmax.f32 %v92, 0.0
  %v98 = vpack.c.bf16 %v97, %v97
  %v99 = vld [vmem:[%s3] sm:$0xf]
  %v100 = vld [vmem:[%s3 + $0x4] sm:$0xf]
  %v101 = vld [vmem:[%s3 + $0x8] sm:$0xf]
  %v102 = vld [vmem:[%s3 + $0xc] sm:$0xf]
  %v103 = vld [vmem:[%s3 + $0x10] sm:$0xf]
  %v104 = vld [vmem:[%s3 + $0x14] sm:$0xf]
  %v105 = vld [vmem:[%s3 + $0x18] sm:$0xf]
  %v106 = vld [vmem:[%s3 + $0x1c] sm:$0xf]
  %v107 = vld [vmem:[%s4] sm:$0x1]
  %v109 = vlaneseq
  %v110 = vshrl.u32 %v109, 7
  %v111 = vsub.s32 0, %v110
  %v112 = vrot.slane %v107, %v111
  %v122 = vunpack.c.l.b16 %v99
  %v123 = vunpack.c.l.b16 %v100
  %v124 = vunpack.c.l.b16 %v101
  %v125 = vunpack.c.l.b16 %v102
  %v126 = vunpack.c.l.b16 %v103
  %v127 = vunpack.c.l.b16 %v104
  %v128 = vunpack.c.l.b16 %v105
  %v129 = vunpack.c.l.b16 %v106
  %v130 = vpack.c.b16 %v123, %v122
  %v131 = vpack.c.b16 %v125, %v124
  %v132 = vpack.c.b16 %v127, %v126
  %v133 = vpack.c.b16 %v129, %v128
  %vm138 = vcmask 523264
  %v140 = vsel %vm138, %v98, 0
  %142 = vmatprep.subr.bf16.mxu0 0
  %143 = vmatpush1.bf16.msra.mxu0 %v130
  %144 = vmatprep.subr.bf16.mxu0 0
  %145 = vmatpush1.bf16.msra.mxu0 %v131
  %146 = vmatprep.subr.bf16.mxu0 0
  %147 = vmatpush1.bf16.msra.mxu0 %v132
  %148 = vmatprep.subr.bf16.mxu0 0
  %149 = vmatpush1.bf16.msra.mxu0 %v133
  %150 = vmatprep.subr.bf16.mxu0 0
  %151 = vmatpush1.bf16.msra.mxu0 0
  %152 = vmatprep.subr.bf16.mxu0 0
  %153 = vmatpush1.bf16.msra.mxu0 0
  %154 = vmatprep.subr.bf16.mxu0 0
  %155 = vmatpush1.bf16.msra.mxu0 0
  %156 = vmatprep.subr.bf16.mxu0 0
  %157 = vmatpush1.bf16.msra.mxu0 0
  %158 = vmatprep.subr.bf16.mxu0 0
  %159 = vmatpush1.bf16.msra.mxu0 0
  %160 = vmatprep.subr.bf16.mxu0 0
  %161 = vmatpush1.bf16.msra.mxu0 0
  %162 = vmatprep.subr.bf16.mxu0 0
  %163 = vmatpush1.bf16.msra.mxu0 0
  %164 = vmatprep.subr.bf16.mxu0 0
  %165 = vmatpush1.bf16.msra.mxu0 0
  %166 = vmatprep.subr.bf16.mxu0 0
  %167 = vmatpush1.bf16.msra.mxu0 0
  %168 = vmatprep.subr.bf16.mxu0 0
  %169 = vmatpush1.bf16.msra.mxu0 0
  %170 = vmatprep.subr.bf16.mxu0 0
  %171 = vmatpush1.bf16.msra.mxu0 0
  %172 = vmatprep.subr.bf16.mxu0 0
  %173 = vmatpush1.bf16.msra.mxu0 0
  %174 = vmatprep.mubr.bf16.mxu0 0
  %175 = vmatmul.mubr.bf16.gmra.mrb[0].mxu0 %v140
  %v176 = vpop.f32.mrb[0].mxu0
  %v177 = vadd.f32 %v112, %v176
  %v178 = vpop.f32.mrb[0].mxu0
  %v179 = vpop.f32.mrb[0].mxu0
  %v180 = vpop.f32.mrb[0].mxu0
  %181 = vdwg.mxu0
  %v182 = vmax.f32 %v177, 0.0
  %v183 = vpack.c.bf16 %v182, %v182
  %v184 = vld [vmem:[%s5] sm:$0xf]
  %v185 = vld [vmem:[%s5 + $0x4] sm:$0xf]
  %v186 = vld [vmem:[%s5 + $0x8] sm:$0xf]
  %v187 = vld [vmem:[%s5 + $0xc] sm:$0xf]
  %v188 = vld [vmem:[%s5 + $0x10] sm:$0xf]
  %v189 = vld [vmem:[%s5 + $0x14] sm:$0xf]
  %v190 = vld [vmem:[%s5 + $0x18] sm:$0xf]
  %v191 = vld [vmem:[%s5 + $0x1c] sm:$0xf]
  %v192 = vld [vmem:[%s6] sm:$0x1]
  %v194 = vlaneseq
  %v195 = vshrl.u32 %v194, 7
  %v196 = vsub.s32 0, %v195
  %v197 = vrot.slane %v192, %v196
  %v207 = vunpack.c.l.b16 %v184
  %v208 = vunpack.c.l.b16 %v185
  %v209 = vunpack.c.l.b16 %v186
  %v210 = vunpack.c.l.b16 %v187
  %v211 = vunpack.c.l.b16 %v188
  %v212 = vunpack.c.l.b16 %v189
  %v213 = vunpack.c.l.b16 %v190
  %v214 = vunpack.c.l.b16 %v191
  %v215 = vpack.c.b16 %v208, %v207
  %v216 = vpack.c.b16 %v210, %v209
  %v217 = vpack.c.b16 %v212, %v211
  %v218 = vpack.c.b16 %v214, %v213
  %v224 = vsel %vm138, %v183, 0
  %226 = vmatprep.subr.bf16.mxu0 0
  %227 = vmatpush1.bf16.msra.mxu0 %v215
  %228 = vmatprep.subr.bf16.mxu0 0
  %229 = vmatpush1.bf16.msra.mxu0 %v216
  %230 = vmatprep.subr.bf16.mxu0 0
  %231 = vmatpush1.bf16.msra.mxu0 %v217
  %232 = vmatprep.subr.bf16.mxu0 0
  %233 = vmatpush1.bf16.msra.mxu0 %v218
  %234 = vmatprep.subr.bf16.mxu0 0
  %235 = vmatpush1.bf16.msra.mxu0 0
  %236 = vmatprep.subr.bf16.mxu0 0
  %237 = vmatpush1.bf16.msra.mxu0 0
  %238 = vmatprep.subr.bf16.mxu0 0
  %239 = vmatpush1.bf16.msra.mxu0 0
  %240 = vmatprep.subr.bf16.mxu0 0
  %241 = vmatpush1.bf16.msra.mxu0 0
  %242 = vmatprep.subr.bf16.mxu0 0
  %243 = vmatpush1.bf16.msra.mxu0 0
  %244 = vmatprep.subr.bf16.mxu0 0
  %245 = vmatpush1.bf16.msra.mxu0 0
  %246 = vmatprep.subr.bf16.mxu0 0
  %247 = vmatpush1.bf16.msra.mxu0 0
  %248 = vmatprep.subr.bf16.mxu0 0
  %249 = vmatpush1.bf16.msra.mxu0 0
  %250 = vmatprep.subr.bf16.mxu0 0
  %251 = vmatpush1.bf16.msra.mxu0 0
  %252 = vmatprep.subr.bf16.mxu0 0
  %253 = vmatpush1.bf16.msra.mxu0 0
  %254 = vmatprep.subr.bf16.mxu0 0
  %255 = vmatpush1.bf16.msra.mxu0 0
  %256 = vmatprep.subr.bf16.mxu0 0
  %257 = vmatpush1.bf16.msra.mxu0 0
  %258 = vmatprep.mubr.bf16.mxu0 0
  %259 = vmatmul.mubr.bf16.gmra.mrb[0].mxu0 %v224
  %v260 = vpop.f32.mrb[0].mxu0
  %v261 = vadd.f32 %v197, %v260
  %v262 = vpop.f32.mrb[0].mxu0
  %v263 = vpop.f32.mrb[0].mxu0
  %v264 = vpop.f32.mrb[0].mxu0
  %265 = vdwg.mxu0
  %v266 = vld [vmem:[%s7] sm:$0xf]
  %v267 = vld [vmem:[%s7 + $0x4] sm:$0xf]
  %v268 = vld [vmem:[%s7 + $0x8] sm:$0xf]
  %v269 = vld [vmem:[%s7 + $0xc] sm:$0xf]
  %v270 = vld [vmem:[%s7 + $0x10] sm:$0xf]
  %v271 = vld [vmem:[%s7 + $0x14] sm:$0xf]
  %v272 = vld [vmem:[%s7 + $0x18] sm:$0xf]
  %v273 = vld [vmem:[%s7 + $0x1c] sm:$0xf]
  %v274 = vld [vmem:[%s8] sm:$0x1]
  %v276 = vlaneseq
  %v277 = vshrl.u32 %v276, 7
  %v278 = vsub.s32 0, %v277
  %v279 = vrot.slane %v274, %v278
  %v289 = vunpack.c.l.b16 %v266
  %v290 = vunpack.c.l.b16 %v267
  %v291 = vunpack.c.l.b16 %v268
  %v292 = vunpack.c.l.b16 %v269
  %v293 = vunpack.c.l.b16 %v270
  %v294 = vunpack.c.l.b16 %v271
  %v295 = vunpack.c.l.b16 %v272
  %v296 = vunpack.c.l.b16 %v273
  %v297 = vpack.c.b16 %v290, %v289
  %v298 = vpack.c.b16 %v292, %v291
  %v299 = vpack.c.b16 %v294, %v293
  %v300 = vpack.c.b16 %v296, %v295
  %305 = vmatprep.subr.bf16.mxu0 0
  %306 = vmatpush1.bf16.msra.mxu0 %v297
  %307 = vmatprep.subr.bf16.mxu0 0
  %308 = vmatpush1.bf16.msra.mxu0 %v298
  %309 = vmatprep.subr.bf16.mxu0 0
  %310 = vmatpush1.bf16.msra.mxu0 %v299
  %311 = vmatprep.subr.bf16.mxu0 0
  %312 = vmatpush1.bf16.msra.mxu0 %v300
  %313 = vmatprep.subr.bf16.mxu0 0
  %314 = vmatpush1.bf16.msra.mxu0 0
  %315 = vmatprep.subr.bf16.mxu0 0
  %316 = vmatpush1.bf16.msra.mxu0 0
  %317 = vmatprep.subr.bf16.mxu0 0
  %318 = vmatpush1.bf16.msra.mxu0 0
  %319 = vmatprep.subr.bf16.mxu0 0
  %320 = vmatpush1.bf16.msra.mxu0 0
  %321 = vmatprep.subr.bf16.mxu0 0
  %322 = vmatpush1.bf16.msra.mxu0 0
  %323 = vmatprep.subr.bf16.mxu0 0
  %324 = vmatpush1.bf16.msra.mxu0 0
  %325 = vmatprep.subr.bf16.mxu0 0
  %326 = vmatpush1.bf16.msra.mxu0 0
  %327 = vmatprep.subr.bf16.mxu0 0
  %328 = vmatpush1.bf16.msra.mxu0 0
  %329 = vmatprep.subr.bf16.mxu0 0
  %330 = vmatpush1.bf16.msra.mxu0 0
  %331 = vmatprep.subr.bf16.mxu0 0
  %332 = vmatpush1.bf16.msra.mxu0 0
  %333 = vmatprep.subr.bf16.mxu0 0
  %334 = vmatpush1.bf16.msra.mxu0 0
  %335 = vmatprep.subr.bf16.mxu0 0
  %336 = vmatpush1.bf16.msra.mxu0 0
  %337 = vmatprep.mubr.bf16.mxu0 0
  %338 = vmatmul.mubr.bf16.gmra.mrb[0].mxu0 %v224
  %v339 = vpop.f32.mrb[0].mxu0
  %v340 = vadd.f32 %v279, %v339
  %v341 = vpop.f32.mrb[0].mxu0
  %v342 = vpop.f32.mrb[0].mxu0
  %v343 = vpop.f32.mrb[0].mxu0
  %344 = vdwg.mxu0
  %v345 = vtanh.pop %v261
  %v346 = vsub.f32 0.0, %v340
  %v347 = vmul.f32 %v346, 1.442695
  %v348 = vpow.pop %v347
  %v349 = vadd.f32 %v348, 1.0
  %v350 = vrcp.pop %v349
  %v351 = vmul.f32 %v350, 10.0
  %v352 = vadd.f32 %v351, -5.0
  %v353 = vmax.f32 %v352, -5.0
  %v354 = vmin.f32 %v353, 5.0
  %v355 = vmul.f32 %v354, 1.442695
  %v356 = vpow.pop %v355
  %v357 = vld [vmem:[%s9] sm:$0xff]
  %v358 = vmul.f32 %v357, %v356
  %v359 = vadd.f32 %v358, %v345
  %vm360 = vcmask 31744
  %361 = vst.msk [vmem:[%s10] sm:$0xff] %vm360, %v359
  %363 = vrot.lane.b32.xlu0 %v356, 4
  %v364 = vpop.permute.xlu0 %363
  %vm366 = vcmask 64544
  %367 = vst.msk [vmem:[%s10] sm:$0xff] %vm366, %v364
  %369 = vrot.lane.b32.xlu0 %v354, 8
  %v370 = vpop.permute.xlu0 %369
  %vm372 = vcmask 97344
  %373 = vst.msk [vmem:[%s10] sm:$0xff] %vm372, %v370
  // Predicated region
  $region42: #{acpolicy_forward.1} parent=0 // pred_check
    _
  $region43: #{acpolicy_forward.1} parent=0 // pred_check_branch
    %375 = sbr.rel (0) target = $region45
  $region44: #{acpolicy_forward.1} parent=0 // pred_region
    _
  $region45: #{acpolicy_forward.1} parent=0 // pred_fallthru
    _
  // Predicated region
  $region46: #{acpolicy_forward.1} parent=0 // pred_check
    _
  $region47: #{acpolicy_forward.1} parent=0 // pred_check_branch
    %377 = sbr.rel (0) target = $region49
  $region48: #{acpolicy_forward.1} parent=0 // pred_region
    _
  $region49: #{acpolicy_forward.1} parent=0 // pred_fallthru
    _

</llo_original>
